<compile_context>
chip_gen: v7x
topology: tpu7x:2x2x1
jax: 0.10.0
libtpu: 0.0.40
codegen_flags: <defaults>
</compile_context>

<pallas_src>
import jax
import jax.numpy as jnp
from jax.experimental import pallas as pl
from jax.experimental.pallas import tpu as pltpu


def _unnormalize_kernel(x_ref, p_ref, o_ref):
    # x_ref: (rb, cb) pixel tile, lane-dense.
    # p_ref: (rb, 2) float32 packed params, column 0 = std, column 1 = mean.
    p = p_ref[...]
    scale = p[:, 0:1]          # (rb, 1): broadcasts along the lane axis
    shift = p[:, 1:2]
    xf = x_ref[...].astype(jnp.float32)
    o_ref[...] = (xf * scale + shift).astype(o_ref.dtype)


def _round_up(a, m):
    return ((a + m - 1) // m) * m


def _even_split(extent, cur_steps, align):
    """Block size (multiple of `align`) giving an even step count >= 2, or None."""
    want = cur_steps + 1 if (cur_steps % 2) else cur_steps
    want = max(want, 2)
    blk = min(_round_up(pl.cdiv(extent, want), align), extent)
    if blk < align:
        return None
    steps = pl.cdiv(extent, blk)
    return blk if (steps >= 2 and steps % 2 == 0) else None


def _chip_block_params():
    """Generation-aware (target_block_bytes, vmem_ceiling_bytes, two_tensorcores)."""
    kind = ""
    try:
        kind = jax.devices()[0].device_kind.lower()
    except Exception:
        pass
    vmem_cap = None
    try:
        vmem_cap = int(pltpu.get_tpu_info().vmem_capacity_bytes)
    except Exception:
        pass

    # Conservative (v5e-class) defaults.
    target, ceiling, two_tc = 2 << 20, 24 << 20, False
    if ("v7" in kind) or ("7x" in kind):
        # v7x: 64 MiB VMEM per TC, ~3.2 TB/s HBM, 2 TensorCores per chip.
        target, ceiling, two_tc = 6 << 20, 44 << 20, True
    elif "v6" in kind:
        # v6e: 128 MiB VMEM, ~1.4 TB/s HBM.
        target, ceiling = 8 << 20, 48 << 20
    elif "v5" in kind:
        target, ceiling = 2 << 20, 24 << 20
    elif vmem_cap is not None:
        # Unknown device name: size off physical VMEM (<= 80 MiB -> v7x-class).
        if vmem_cap <= (80 << 20):
            target, ceiling, two_tc = 6 << 20, 44 << 20, True
        else:
            target, ceiling = 6 << 20, 40 << 20
    if vmem_cap is not None:
        ceiling = min(ceiling, (vmem_cap * 3) // 4)
    return target, ceiling, two_tc


def _per_channel(v, C):
    v = jnp.asarray(v, dtype=jnp.float32).reshape(-1)
    if v.size == 1:
        v = jnp.broadcast_to(v, (C,))
    if v.size != C:
        raise ValueError(f"mean/std must be a scalar or length-{C}, got {v.size}")
    return v


def unnormalize(x, mean, std, *, target_block_bytes=None):
    """Pallas TPU unnormalize: x * std + mean with per-channel mean/std.

    x: (N, C, H, W); mean, std: scalars or length-C vectors. Returns x.dtype.
    Compute is done in f32 and cast back (slightly more accurate than a
    pure-bf16 reference for bf16 inputs; float inputs expected).
    """
    N, C, H, W = x.shape
    itemsize = jnp.dtype(x.dtype).itemsize

    tgt_auto, vmem_ceiling, two_tc = _chip_block_params()
    target = target_block_bytes if target_block_bytes is not None else tgt_auto

    std_c = _per_channel(std, C)
    mean_c = _per_channel(mean, C)

    # ---- lane-dense 2D view; fold part of H into rows when N*C < 8 so vreg /
    # (8,128) tile sublanes are filled, as long as the lane axis stays >= 128.
    NC = N * C
    fold = 1
    if NC < 8 and H > 1:
        need = -(-8 // NC)                        # ceil(8 / NC)
        for k in range(need, H + 1):
            if H % k == 0:
                if (H // k) * W >= 128 or H * W < 128:
                    fold = k
                break
    rows = NC * fold
    cols = (H // fold) * W

    x2 = x.reshape(rows, cols)
    # Packed per-row params: column 0 = std (scale), column 1 = mean (shift).
    scale = jnp.repeat(jnp.tile(std_c, N), fold)
    shift = jnp.repeat(jnp.tile(mean_c, N), fold)
    params = jnp.stack([scale, shift], axis=1)    # (rows, 2) float32

    # ---- byte-targeted block sizing (HBM-bandwidth bound) --------------------
    # Column (lane) block: full width when 8 rows fit the budget, else a large
    # multiple of 128 so stores stay unmasked / lane-dense.
    if cols <= 128 or 8 * cols * itemsize <= target:
        cb = cols
    else:
        cb = max(128, (target // (8 * itemsize)) // 128 * 128)

    # Row (sublane) block: as many rows as fit the budget, multiple of 8
    # (or the full row count when rows <= 8).
    if rows <= 8:
        rb = rows
    else:
        rb = max(8, target // (cb * itemsize))
        rb = min(rb, rows)
        rb = max(8, (rb // 8) * 8)

    # ---- megacore (v7x): even, >=2 step count on one parallel axis -----------
    if two_tc and rows * cols * itemsize >= (1 << 20):
        r_steps, c_steps = pl.cdiv(rows, rb), pl.cdiv(cols, cb)
        if (r_steps * c_steps) % 2 == 1:          # odd total => both axes odd
            new_cb = _even_split(cols, c_steps, 128)
            if new_cb is not None:
                cb = new_cb
            else:
                new_rb = _even_split(rows, r_steps, 8)
                if new_rb is not None:
                    rb = new_rb

    grid = (pl.cdiv(rows, rb), pl.cdiv(cols, cb))

    # ---- explicit VMEM budget from the actual 2-deep pipeline footprint ------
    block_bytes = rb * cb * itemsize              # one x block == one out block
    param_block_bytes = rb * 128 * 4              # (rb, 2) f32, lane-padded
    pipeline_bytes = 2 * (2 * block_bytes + param_block_bytes)
    vmem_limit = min(vmem_ceiling, pipeline_bytes + (4 << 20))
    vmem_limit = max(vmem_limit, pipeline_bytes + (1 << 20), 8 << 20)

    out2 = pl.pallas_call(
        _unnormalize_kernel,
        out_shape=jax.ShapeDtypeStruct((rows, cols), x.dtype),
        grid=grid,
        in_specs=[
            pl.BlockSpec((rb, cb), lambda i, j: (i, j)),
            # Params: block index constant along the column axis -> re-DMA'd
            # only when the row block changes.
            pl.BlockSpec((rb, 2), lambda i, j: (i, 0)),
        ],
        out_specs=pl.BlockSpec((rb, cb), lambda i, j: (i, j)),
        compiler_params=pltpu.CompilerParams(
            dimension_semantics=("parallel", "parallel"),
            vmem_limit_bytes=int(vmem_limit),
        ),
    )(x2, params)

    return out2.reshape(N, C, H, W)


if __name__ == "__main__":
    key = jax.random.PRNGKey(0)
    N, C, H, W = 2, 4, 16, 16

    x = jax.random.normal(key, (N, C, H, W), dtype=jnp.float32)
    # Deterministic per-channel "parameters" (image unnormalization style).
    mean = jnp.array([0.485, 0.456, 0.406, 0.5], dtype=jnp.float32)
    std = jnp.array([0.229, 0.224, 0.225, 0.25], dtype=jnp.float32)

    out = jax.block_until_ready(unnormalize(x, mean, std))

    # Reference: plain JAX broadcast, same as tensor.mul(std).add(mean).
    ref = x * std.reshape(1, C, 1, 1) + mean.reshape(1, C, 1, 1)
    assert out.shape == (N, C, H, W)
    assert out.dtype == x.dtype
    assert jnp.allclose(out, ref, atol=1e-6, rtol=1e-6)

    print("KERNEL_OK")
</pallas_src>

<mosaic_0001>
module attributes {stable_mosaic.version = 11 : i64} {
  func.func @_unnormalize_kernel(%arg0: i32, %arg1: i32, %arg2: memref<8x256xf32, #tpu.memory_space<vmem>>, %arg3: memref<8x2xf32, #tpu.memory_space<vmem>>, %arg4: memref<8x256xf32, #tpu.memory_space<vmem>>) attributes {dimension_semantics = [#tpu.dimension_semantics<parallel>, #tpu.dimension_semantics<parallel>], iteration_bounds = array<i64: 1, 1>, scalar_prefetch = 0 : i64, scratch_operands = 0 : i64, tpu.core_type = #tpu.core_type<tc>, window_params = [{transform_indices = @transform_0, window_bounds = array<i64: 8, 256>}, {transform_indices = @transform_1, window_bounds = array<i64: 8, 2>}, {transform_indices = @transform_2, window_bounds = array<i64: 8, 256>}]} {
    %c0 = arith.constant 0 : index
    %c0_0 = arith.constant 0 : index
    %0 = vector.load %arg3[%c0, %c0_0] : memref<8x2xf32, #tpu.memory_space<vmem>>, vector<8x2xf32>
    %1 = vector.extract_strided_slice %0 {offsets = [0, 0], sizes = [8, 1], strides = [1, 1]} : vector<8x2xf32> to vector<8x1xf32>
    %2 = vector.extract_strided_slice %0 {offsets = [0, 1], sizes = [8, 1], strides = [1, 1]} : vector<8x2xf32> to vector<8x1xf32>
    %c0_1 = arith.constant 0 : index
    %c0_2 = arith.constant 0 : index
    %3 = vector.load %arg2[%c0_1, %c0_2] : memref<8x256xf32, #tpu.memory_space<vmem>>, vector<8x256xf32>
    %4 = vector.broadcast %1 : vector<8x1xf32> to vector<8x256xf32>
    %5 = arith.mulf %3, %4 : vector<8x256xf32>
    %6 = vector.broadcast %2 : vector<8x1xf32> to vector<8x256xf32>
    %7 = arith.addf %5, %6 : vector<8x256xf32>
    %c0_3 = arith.constant 0 : index
    %c0_4 = arith.constant 0 : index
    %8 = vector.load %arg4[%c0_3, %c0_4] : memref<8x256xf32, #tpu.memory_space<vmem>>, vector<8x256xf32>
    tpu.vector_store %arg4[%c0_3, %c0_4], %7 {strides = array<i32>} : memref<8x256xf32, #tpu.memory_space<vmem>>, vector<8x256xf32>,
    return
  }
  func.func @transform_0(%arg0: i32, %arg1: i32) -> (i32, i32) {
    %c0_i32 = arith.constant 0 : i32
    return %arg0, %arg1 : i32, i32
  }
  func.func @transform_1(%arg0: i32, %arg1: i32) -> (i32, i32) {
    %c0_i32 = arith.constant 0 : i32
    %c0_i32_0 = arith.constant 0 : i32
    return %arg0, %c0_i32 : i32, i32
  }
  func.func @transform_2(%arg0: i32, %arg1: i32) -> (i32, i32) {
    %c0_i32 = arith.constant 0 : i32
    return %arg0, %arg1 : i32, i32
  }
}

</mosaic_0001>

<llo_original>
// kernel: tpu_custom_call.1
$region0: #{tpu_custom_call.1}
  #allocation0 [shape = 'u32[]', space=smem, size = 0x4, offset = 0x4, fixed_abs, tag = 'smem constant byte address 0x4 - core index']
  #allocation1 [shape = 'u32[144,128]{1,0:T(1,128)}', space=vmem, size = 0x12000, scoped, tag = 'internal scratch']
  %s0 = inlined_call_operand.hbm [shape: f32[8,256], index: 0, kind: input, shape index: {}]
  %s1 = inlined_call_operand.vmem [shape: f32[8,2], index: 1, kind: input, shape index: {}]
  %s2 = inlined_call_operand.hbm [shape: f32[8,256], index: 2, kind: output, shape index: {}]
  %s3 = sld [smem:[#allocation0]]
  $region22: #{tpu_custom_call.1} parent=0
    _
  %s5 = ssub.s32 1, %s3
  %s6 = scalar_select 0, %s5, %s3
  $region1: #{tpu_custom_call.1} parent=0
    #allocation2 [shape = 'u8[8192]{0}', space=vmem, size = 0x2000, scoped, tag = 'input window, operand 0, single buffered']
    #allocation3 [shape = 's32[1]{0}', space=sflag, size = 0x4, scoped, tag = 'scoped memory for tpu_custom_call.1']
    #allocation4 [shape = 's32[1]{0}', space=sflag, size = 0x4, scoped, tag = 'scoped memory for tpu_custom_call.1']
    #allocation5 [shape = 'u8[8192]{0}', space=vmem, size = 0x2000, scoped, tag = 'output window, operand 0, single buffered']
    %7 = vsyncpa [#allocation3], 0
    %8 = vsyncpa [#allocation4], 0
    // Predicated region
    $region2: #{tpu_custom_call.1} parent=1 // pred_check
      _
    $region3: #{tpu_custom_call.1} parent=1 // pred_check_branch
      %10 = sbr.rel (0) target = $region5
    $region4: #{tpu_custom_call.1} parent=1 // pred_region
      %s12 = ssub.s32 256, 256
      %13 = vsyncadd [#allocation3], %s12
      %s15 = sshll.u32 [#allocation2], 4
      %s16 = int_to_ptr.vmem [resolvable:$true] %s15
      %18 = dma.hbm_to_vmem [thread:$0]  %s0, 256, %s16, [#allocation3]
    $region5: #{tpu_custom_call.1} parent=1 // pred_fallthru
      _
    // Predicated region
    $region6: #{tpu_custom_call.1} parent=1 // pred_check
      _
    $region7: #{tpu_custom_call.1} parent=1 // pred_check_branch
      %20 = sbr.rel (0) target = $region9
    $region8: #{tpu_custom_call.1} parent=1 // pred_region
      _
    $region9: #{tpu_custom_call.1} parent=1 // pred_fallthru
      _
    // Predicated region
    $region10: #{tpu_custom_call.1} parent=1 // pred_check
      _
    $region11: #{tpu_custom_call.1} parent=1 // pred_check_branch
      %22 = sbr.rel (0) target = $region13
    $region12: #{tpu_custom_call.1} parent=1 // pred_region
      %23 = dma.done [#allocation3], 256
    $region13: #{tpu_custom_call.1} parent=1 // pred_fallthru
      _
    %v24 = vld [vmem:[%s1] sm:$0xff]
    %v25 = vld [vmem:[#allocation2] sm:$0xff]
    %v26 = vld [vmem:[#allocation2 + $0x8] sm:$0xff]
    %28 = vset.pattern.permute.xlu0 0
    %29 = vperm.xlu0 %28, %v24
    %v30 = vpop.permute.xlu0 %29
    %v32 = vmul.f32 %v25, %v30
    %v33 = vmul.f32 %v26, %v30
    %34 = vset.pattern.permute.xlu0 1
    %35 = vperm.xlu0 %34, %v24
    %v36 = vpop.permute.xlu0 %35
    %v38 = vadd.f32 %v32, %v36
    %v39 = vadd.f32 %v33, %v36
    %40 = vst [vmem:[#allocation5] sm:$0xff] %v38
    %41 = vst [vmem:[#allocation5 + $0x8] sm:$0xff] %v39
    // Predicated region
    $region14: #{tpu_custom_call.1} parent=1 // pred_check
      _
    $region15: #{tpu_custom_call.1} parent=1 // pred_check_branch
      %43 = sbr.rel (0) target = $region17
    $region16: #{tpu_custom_call.1} parent=1 // pred_region
      %s45 = ssub.s32 256, 256
      %46 = vsyncadd [#allocation4], %s45
      %s48 = sshll.u32 [#allocation5], 4
      %s49 = int_to_ptr.vmem [resolvable:$true] %s48
      %51 = dma.vmem_to_hbm [thread:$0]  %s49, 256, %s2, [#allocation4]
    $region17: #{tpu_custom_call.1} parent=1 // pred_fallthru
      _
    // Predicated region
    $region18: #{tpu_custom_call.1} parent=1 // pred_check
      _
    $region19: #{tpu_custom_call.1} parent=1 // pred_check_branch
      %53 = sbr.rel (0) target = $region21
    $region20: #{tpu_custom_call.1} parent=1 // pred_region
      %54 = dma.done [#allocation4], 256
    $region21: #{tpu_custom_call.1} parent=1 // pred_fallthru
      _
    %55 = vsyncpa [#allocation3], 1
    %56 = vsyncpa [#allocation4], 1

</llo_original>
